<compile_context>
chip_gen: v5e
topology: v5e:2x2
jax: 0.10.0
libtpu: 0.0.40
codegen_flags: <defaults>
</compile_context>

<pallas_src>
import functools

import jax
import jax.numpy as jnp
from jax.experimental import pallas as pl
from jax.experimental.pallas import tpu as pltpu


def _round_up(a: int, m: int) -> int:
    return ((a + m - 1) // m) * m


# ---------------------------------------------------------------------------
# Kernel
# ---------------------------------------------------------------------------
def dnn_kernel(x_ref, w1_ref, b1_ref, w2_ref, b2_ref, o_ref, *, num_classes):
    # x_ref:  (TILE_B, input_dim)   f32   (cast to bf16 here, not in a
    #                                      separate XLA op)
    # w1_ref: (input_dim, mid_pad)  bf16   b1_ref: (1, mid_pad)  f32
    # w2_ref: (mid_pad, out_pad)    bf16   b2_ref: (1, out_pad)  f32
    #                                      (padded cols of b2 hold -1e30)
    # o_ref:  (TILE_B, num_classes) f32
    x = x_ref[...].astype(jnp.bfloat16)

    # fc1 + ReLU  (bf16 operands on the MXU, f32 accumulate)
    h = jnp.dot(x, w1_ref[...], preferred_element_type=jnp.float32) + b1_ref[...]
    h = jnp.maximum(h, 0.0)

    # fc (output layer) -- bf16 operands, f32 accumulate.
    logits = jnp.dot(h.astype(jnp.bfloat16), w2_ref[...],
                     preferred_element_type=jnp.float32) + b2_ref[...]

    # log_softmax: padded class columns are -1e30 (baked into b2), so the max
    # ignores them and exp underflows to 0 -- no iota / where mask needed.
    m = jnp.max(logits, axis=-1, keepdims=True)
    shifted = logits - m
    lse = jnp.log(jnp.sum(jnp.exp(shifted), axis=-1, keepdims=True))
    o_ref[...] = shifted[:, :num_classes] - lse


# ---------------------------------------------------------------------------
# One-time parameter preparation (hoisted out of the per-call path)
# ---------------------------------------------------------------------------
def prepare_params(w1, b1, w2, b2):
    """Pad / cast weights once.  w1:(in,mid) w2:(mid,cls), biases 1-D."""
    LANE = 128
    input_dim, mid_dim = w1.shape
    num_classes = w2.shape[1]
    mid_pad = _round_up(mid_dim, LANE)   # keep 128 (don't "fill" the 256 MXU)
    out_pad = _round_up(num_classes, LANE)

    w1p = jnp.zeros((input_dim, mid_pad), jnp.bfloat16).at[:, :mid_dim].set(
        w1.astype(jnp.bfloat16))
    b1p = jnp.zeros((1, mid_pad), jnp.float32).at[:, :mid_dim].set(
        b1.astype(jnp.float32).reshape(1, -1))
    w2p = jnp.zeros((mid_pad, out_pad), jnp.bfloat16).at[:mid_dim, :num_classes].set(
        w2.astype(jnp.bfloat16))
    # -1e30 in the padded class columns replaces the in-kernel class mask.
    b2p = jnp.full((1, out_pad), -1e30, jnp.float32).at[:, :num_classes].set(
        b2.astype(jnp.float32).reshape(1, -1))
    return w1p, b1p, w2p, b2p, num_classes


# ---------------------------------------------------------------------------
# Forward wrapper
# ---------------------------------------------------------------------------
def dnn_forward(x_nchw, w1p, b1p, w2p, b2p, num_classes, *, tile_b=2048):
    """x_nchw: (B, C, H, W) float32. Returns (B, num_classes) log-probs f32."""
    B = x_nchw.shape[0]
    input_dim, mid_pad = w1p.shape
    out_pad = w2p.shape[1]

    # Flatten only (free, layout-compatible reshape); the bf16 cast happens
    # inside the kernel.
    x2d = x_nchw.reshape(B, input_dim)

    # ---- batch tiling (no jnp.pad of x) ----
    SUB = 8  # f32 sublane packing
    if B % SUB != 0 and B <= tile_b:
        # Small / unaligned batch: one block equal to the full batch dim
        # (allowed by the (8,128) rule when block == array dim) -> no padding.
        tb = B
    else:
        tb = _round_up(min(tile_b, _round_up(B, SUB)), SUB)
        # v7x: guarantee >=2 grid steps so "parallel" can shard across both
        # TensorCores (no-op cost on single-TC v5e/v6e).
        if tb >= B and B >= 2 * SUB:
            tb = _round_up(pl.cdiv(B, 2), SUB)
    grid_b = pl.cdiv(B, tb)
    # A partial last tile (B % tb != 0) is handled by Pallas boundary-block
    # masking: out-of-range rows are never written back.

    # ---- VMEM budget: ~footprint + headroom, capped well under v7x's 64 MiB.
    x_io = 2 * tb * input_dim * 4                      # double-buffered x tiles
    o_io = 2 * tb * num_classes * 4                    # double-buffered outputs
    weights = 2 * (input_dim * mid_pad * 2 + mid_pad * out_pad * 2
                   + (mid_pad + out_pad) * 4)
    temps = tb * input_dim * 2 + 2 * tb * mid_pad * 4 + tb * out_pad * 4
    vmem_limit = max(32 << 20, min(x_io + o_io + weights + temps + (4 << 20),
                                   48 << 20))

    out = pl.pallas_call(
        functools.partial(dnn_kernel, num_classes=num_classes),
        out_shape=jax.ShapeDtypeStruct((B, num_classes), jnp.float32),
        grid=(grid_b,),
        in_specs=[
            pl.BlockSpec((tb, input_dim), lambda i: (i, 0)),       # x: tiled
            pl.BlockSpec((input_dim, mid_pad), lambda i: (0, 0)),  # w1: resident
            pl.BlockSpec((1, mid_pad), lambda i: (0, 0)),          # b1
            pl.BlockSpec((mid_pad, out_pad), lambda i: (0, 0)),    # w2
            pl.BlockSpec((1, out_pad), lambda i: (0, 0)),          # b2
        ],
        out_specs=pl.BlockSpec((tb, num_classes), lambda i: (i, 0)),
        compiler_params=pltpu.CompilerParams(
            dimension_semantics=("parallel",),
            vmem_limit_bytes=int(vmem_limit),
        ),
    )(x2d, w1p, b1p, w2p, b2p)
    return out


# ---------------------------------------------------------------------------
# Parameter init (mirrors nn.Linear's uniform(-1/sqrt(fan_in), +...))
# ---------------------------------------------------------------------------
def init_params(key, input_dim=1 * 28 * 28, mid_dim=100, num_classes=10):
    """Weights stored transposed: (in_dim, out_dim)."""
    k1, k2, k3, k4 = jax.random.split(key, 4)
    bound1 = 1.0 / jnp.sqrt(input_dim)
    bound2 = 1.0 / jnp.sqrt(mid_dim)
    w1 = jax.random.uniform(k1, (input_dim, mid_dim), jnp.float32, -bound1, bound1)
    b1 = jax.random.uniform(k2, (mid_dim,), jnp.float32, -bound1, bound1)
    w2 = jax.random.uniform(k3, (mid_dim, num_classes), jnp.float32, -bound2, bound2)
    b2 = jax.random.uniform(k4, (num_classes,), jnp.float32, -bound2, bound2)
    return w1, b1, w2, b2


if __name__ == "__main__":
    key = jax.random.PRNGKey(0)
    k_x, k_p = jax.random.split(key)

    B, C, H, W = 2, 1, 28, 28  # matches the module's default input_dim = 1*28*28
    x = jax.random.normal(k_x, (B, C, H, W), dtype=jnp.float32)
    w1, b1, w2, b2 = init_params(k_p)

    # One-time weight preparation (pad + bf16 cast), then the fused forward.
    w1p, b1p, w2p, b2p, num_classes = prepare_params(w1, b1, w2, b2)
    out = dnn_forward(x, w1p, b1p, w2p, b2p, num_classes)
    out = jax.block_until_ready(out)

    # Sanity: shape + log-softmax rows exponentiate-sum to ~1.
    assert out.shape == (B, num_classes)
    row_sums = jnp.sum(jnp.exp(out), axis=1)
    assert bool(jnp.all(jnp.abs(row_sums - 1.0) < 1e-3))

    # Cross-check against a pure-JAX f32 reference (bf16 matmul tolerance).
    xf = x.reshape(B, -1)
    ref = jax.nn.log_softmax(jnp.maximum(xf @ w1 + b1, 0.0) @ w2 + b2, axis=1)
    assert bool(jnp.all(jnp.abs(out - ref) < 5e-2))

    print("KERNEL_OK")
</pallas_src>

<mosaic_0001>
module attributes {stable_mosaic.version = 11 : i64} {
  func.func @dnn_kernel(%arg0: i32, %arg1: memref<2x784xf32, #tpu.memory_space<vmem>>, %arg2: memref<784x128xbf16, #tpu.memory_space<vmem>>, %arg3: memref<1x128xf32, #tpu.memory_space<vmem>>, %arg4: memref<128x128xbf16, #tpu.memory_space<vmem>>, %arg5: memref<1x128xf32, #tpu.memory_space<vmem>>, %arg6: memref<2x10xf32, #tpu.memory_space<vmem>>) attributes {dimension_semantics = [#tpu.dimension_semantics<parallel>], iteration_bounds = array<i64: 1>, scalar_prefetch = 0 : i64, scratch_operands = 0 : i64, tpu.core_type = #tpu.core_type<tc>, window_params = [{transform_indices = @transform_0, window_bounds = array<i64: 2, 784>}, {pipeline_mode = #tpu.pipeline_mode<synchronous>, transform_indices = @transform_1, window_bounds = array<i64: 784, 128>}, {pipeline_mode = #tpu.pipeline_mode<synchronous>, transform_indices = @transform_2, window_bounds = array<i64: 1, 128>}, {pipeline_mode = #tpu.pipeline_mode<synchronous>, transform_indices = @transform_3, window_bounds = array<i64: 128, 128>}, {pipeline_mode = #tpu.pipeline_mode<synchronous>, transform_indices = @transform_4, window_bounds = array<i64: 1, 128>}, {transform_indices = @transform_5, window_bounds = array<i64: 2, 10>}]} {
    %c0 = arith.constant 0 : index
    %c0_0 = arith.constant 0 : index
    %0 = vector.load %arg1[%c0, %c0_0] : memref<2x784xf32, #tpu.memory_space<vmem>>, vector<2x784xf32>
    %1 = arith.truncf %0 : vector<2x784xf32> to vector<2x784xbf16>
    %c0_1 = arith.constant 0 : index
    %c0_2 = arith.constant 0 : index
    %2 = vector.load %arg2[%c0_1, %c0_2] : memref<784x128xbf16, #tpu.memory_space<vmem>>, vector<784x128xbf16>
    %cst = arith.constant dense<0.000000e+00> : vector<2x128xf32>
    %3 = tpu.matmul %1, %2, %cst {dimension_numbers = #tpu.dot_dimension_numbers<[1], [0], [0], [1], [0, 0, 1, 1], [], []>} : vector<2x784xbf16>, vector<784x128xbf16>, vector<2x128xf32> -> vector<2x128xf32>
    %c0_3 = arith.constant 0 : index
    %c0_4 = arith.constant 0 : index
    %4 = vector.load %arg3[%c0_3, %c0_4] : memref<1x128xf32, #tpu.memory_space<vmem>>, vector<1x128xf32>
    %5 = vector.broadcast %4 : vector<1x128xf32> to vector<2x128xf32>
    %6 = arith.addf %3, %5 : vector<2x128xf32>
    %cst_5 = arith.constant 0.000000e+00 : f32
    %7 = vector.broadcast %cst_5 : f32 to vector<2x128xf32>
    %8 = arith.maximumf %6, %7 : vector<2x128xf32>
    %9 = arith.truncf %8 : vector<2x128xf32> to vector<2x128xbf16>
    %c0_6 = arith.constant 0 : index
    %c0_7 = arith.constant 0 : index
    %10 = vector.load %arg4[%c0_6, %c0_7] : memref<128x128xbf16, #tpu.memory_space<vmem>>, vector<128x128xbf16>
    %cst_8 = arith.constant dense<0.000000e+00> : vector<2x128xf32>
    %11 = tpu.matmul %9, %10, %cst_8 {dimension_numbers = #tpu.dot_dimension_numbers<[1], [0], [0], [1], [0, 0, 1, 1], [], []>} : vector<2x128xbf16>, vector<128x128xbf16>, vector<2x128xf32> -> vector<2x128xf32>
    %c0_9 = arith.constant 0 : index
    %c0_10 = arith.constant 0 : index
    %12 = vector.load %arg5[%c0_9, %c0_10] : memref<1x128xf32, #tpu.memory_space<vmem>>, vector<1x128xf32>
    %13 = vector.broadcast %12 : vector<1x128xf32> to vector<2x128xf32>
    %14 = arith.addf %11, %13 : vector<2x128xf32>
    %cst_11 = arith.constant dense<0xFF800000> : vector<2xf32>
    %15 = vector.multi_reduction <maximumf>, %14, %cst_11 [1] : vector<2x128xf32> to vector<2xf32>
    %16 = vector.shape_cast %15 : vector<2xf32> to vector<2x1xf32>
    %17 = vector.broadcast %16 : vector<2x1xf32> to vector<2x128xf32>
    %18 = arith.subf %14, %17 : vector<2x128xf32>
    %19 = math.exp %18 : vector<2x128xf32>
    %cst_12 = arith.constant dense<0.000000e+00> : vector<2xf32>
    %20 = vector.multi_reduction <add>, %19, %cst_12 [1] : vector<2x128xf32> to vector<2xf32>
    %21 = vector.shape_cast %20 : vector<2xf32> to vector<2x1xf32>
    %22 = math.log %21 : vector<2x1xf32>
    %23 = vector.extract_strided_slice %18 {offsets = [0, 0], sizes = [2, 10], strides = [1, 1]} : vector<2x128xf32> to vector<2x10xf32>
    %24 = vector.broadcast %22 : vector<2x1xf32> to vector<2x10xf32>
    %25 = arith.subf %23, %24 : vector<2x10xf32>
    %c0_13 = arith.constant 0 : index
    %c0_14 = arith.constant 0 : index
    %26 = vector.load %arg6[%c0_13, %c0_14] : memref<2x10xf32, #tpu.memory_space<vmem>>, vector<2x10xf32>
    tpu.vector_store %arg6[%c0_13, %c0_14], %25 {strides = array<i32>} : memref<2x10xf32, #tpu.memory_space<vmem>>, vector<2x10xf32>,
    return
  }
  func.func @transform_0(%arg0: i32) -> (i32, i32) {
    %c0_i32 = arith.constant 0 : i32
    %c0_i32_0 = arith.constant 0 : i32
    return %arg0, %c0_i32 : i32, i32
  }
  func.func @transform_1(%arg0: i32) -> (i32, i32) {
    %c0_i32 = arith.constant 0 : i32
    %c0_i32_0 = arith.constant 0 : i32
    %c0_i32_1 = arith.constant 0 : i32
    return %c0_i32, %c0_i32_0 : i32, i32
  }
  func.func @transform_2(%arg0: i32) -> (i32, i32) {
    %c0_i32 = arith.constant 0 : i32
    %c0_i32_0 = arith.constant 0 : i32
    %c0_i32_1 = arith.constant 0 : i32
    return %c0_i32, %c0_i32_0 : i32, i32
  }
  func.func @transform_3(%arg0: i32) -> (i32, i32) {
    %c0_i32 = arith.constant 0 : i32
    %c0_i32_0 = arith.constant 0 : i32
    %c0_i32_1 = arith.constant 0 : i32
    return %c0_i32, %c0_i32_0 : i32, i32
  }
  func.func @transform_4(%arg0: i32) -> (i32, i32) {
    %c0_i32 = arith.constant 0 : i32
    %c0_i32_0 = arith.constant 0 : i32
    %c0_i32_1 = arith.constant 0 : i32
    return %c0_i32, %c0_i32_0 : i32, i32
  }
  func.func @transform_5(%arg0: i32) -> (i32, i32) {
    %c0_i32 = arith.constant 0 : i32
    %c0_i32_0 = arith.constant 0 : i32
    return %arg0, %c0_i32 : i32, i32
  }
}

</mosaic_0001>

<llo_original>
// kernel: tpu_custom_call.1
$region0: #{tpu_custom_call.1}
  #allocation0 [shape = 'u32[]', space=smem, size = 0x4, offset = 0x4, fixed_abs, tag = 'smem constant byte address 0x4 - core index']
  #allocation1 [shape = 'u32[72,128]{1,0:T(1,128)}', space=vmem, size = 0x9000, scoped, tag = 'internal scratch']
  %s0 = inlined_call_operand.hbm [shape: f32[2,784], index: 0, kind: input, shape index: {}]
  %s1 = inlined_call_operand.hbm [shape: bf16[784,128], index: 1, kind: input, shape index: {}]
  %s2 = inlined_call_operand.vmem [shape: f32[1,128], index: 2, kind: input, shape index: {}]
  %s3 = inlined_call_operand.hbm [shape: bf16[128,128], index: 3, kind: input, shape index: {}]
  %s4 = inlined_call_operand.vmem [shape: f32[1,128], index: 4, kind: input, shape index: {}]
  %s5 = inlined_call_operand.hbm [shape: f32[2,10], index: 5, kind: output, shape index: {}]
  %s6 = sld [smem:[#allocation0]]
  $region42: #{tpu_custom_call.1} parent=0
    _
  %s8 = ssub.s32 1, %s6
  %s9 = scalar_select 0, %s8, %s6
  $region1: #{tpu_custom_call.1} parent=0
    #allocation2 [shape = 'u8[7168]{0}', space=vmem, size = 0x1c00, scoped, tag = 'input window, operand 0, single buffered']
    #allocation3 [shape = 's32[1]{0}', space=sflag, size = 0x4, scoped, tag = 'scoped memory for tpu_custom_call.1']
    #allocation4 [shape = 's32[1]{0}', space=sflag, size = 0x4, scoped, tag = 'scoped memory for tpu_custom_call.1']
    #allocation5 [shape = 'u8[200704]{0}', space=vmem, size = 0x31000, scoped, tag = 'input window, operand 1, single buffered']
    #allocation6 [shape = 's32[1]{0}', space=sflag, size = 0x4, scoped, tag = 'scoped memory for tpu_custom_call.1']
    #allocation7 [shape = 'u8[32768]{0}', space=vmem, size = 0x8000, scoped, tag = 'input window, operand 3, single buffered']
    #allocation8 [shape = 'u8[1024]{0}', space=vmem, size = 0x400, scoped, tag = 'output window, operand 0, single buffered']
    %10 = vsyncpa [#allocation3], 0
    %11 = vsyncpa [#allocation6], 0
    %12 = vsyncpa [#allocation4], 0
    // Predicated region
    $region2: #{tpu_custom_call.1} parent=1 // pred_check
      _
    $region3: #{tpu_custom_call.1} parent=1 // pred_check_branch
      %14 = sbr.rel (0) target = $region5
    $region4: #{tpu_custom_call.1} parent=1 // pred_region
      %16 = vsyncadd [#allocation3], 0
      %s18 = sshll.u32 %s0, 4
      %s19 = int_to_ptr.hbm [resolvable:$true] %s18
      %s20 = sshll.u32 [#allocation2], 4
      %s21 = int_to_ptr.vmem [resolvable:$true] %s20
      %23 = dma.hbm_to_vmem [thread:$0]  %s19, 224, %s21, [#allocation3]
    $region5: #{tpu_custom_call.1} parent=1 // pred_fallthru
      _
    // Predicated region
    $region6: #{tpu_custom_call.1} parent=1 // pred_check
      _
    $region7: #{tpu_custom_call.1} parent=1 // pred_check_branch
      %25 = sbr.rel (0) target = $region9
    $region8: #{tpu_custom_call.1} parent=1 // pred_region
      %27 = vsyncadd [#allocation6], 0
      %s28 = sshll.u32 %s1, 4
      %s29 = int_to_ptr.hbm [resolvable:$true] %s28
      %s30 = sshll.u32 [#allocation5], 4
      %s31 = int_to_ptr.vmem [resolvable:$true] %s30
      %36 = dma.hbm_to_vmem [thread:$0]  %s29, 6272, %s31, [#allocation6], 64, 64, 4
    $region9: #{tpu_custom_call.1} parent=1 // pred_fallthru
      _
    // Predicated region
    $region10: #{tpu_custom_call.1} parent=1 // pred_check
      _
    $region11: #{tpu_custom_call.1} parent=1 // pred_check_branch
      %38 = sbr.rel (0) target = $region13
    $region12: #{tpu_custom_call.1} parent=1 // pred_region
      _
    $region13: #{tpu_custom_call.1} parent=1 // pred_fallthru
      _
    // Predicated region
    $region14: #{tpu_custom_call.1} parent=1 // pred_check
      _
    $region15: #{tpu_custom_call.1} parent=1 // pred_check_branch
      %40 = sbr.rel (0) target = $region17
    $region16: #{tpu_custom_call.1} parent=1 // pred_region
      %42 = vsyncadd [#allocation6], 0
      %s43 = sshll.u32 %s3, 4
      %s44 = int_to_ptr.hbm [resolvable:$true] %s43
      %s45 = sshll.u32 [#allocation7], 4
      %s46 = int_to_ptr.vmem [resolvable:$true] %s45
      %51 = dma.hbm_to_vmem [thread:$0]  %s44, 1024, %s46, [#allocation6], 64, 64, 4
    $region17: #{tpu_custom_call.1} parent=1 // pred_fallthru
      _
    // Predicated region
    $region18: #{tpu_custom_call.1} parent=1 // pred_check
      _
    $region19: #{tpu_custom_call.1} parent=1 // pred_check_branch
      %53 = sbr.rel (0) target = $region21
    $region20: #{tpu_custom_call.1} parent=1 // pred_region
      _
    $region21: #{tpu_custom_call.1} parent=1 // pred_fallthru
      _
    // Predicated region
    $region22: #{tpu_custom_call.1} parent=1 // pred_check
      _
    $region23: #{tpu_custom_call.1} parent=1 // pred_check_branch
      %55 = sbr.rel (0) target = $region25
    $region24: #{tpu_custom_call.1} parent=1 // pred_region
      %57 = dma.done [#allocation3], 224
    $region25: #{tpu_custom_call.1} parent=1 // pred_fallthru
      _
    // Predicated region
    $region26: #{tpu_custom_call.1} parent=1 // pred_check
      _
    $region27: #{tpu_custom_call.1} parent=1 // pred_check_branch
      %59 = sbr.rel (0) target = $region29
    $region28: #{tpu_custom_call.1} parent=1 // pred_region
      %61 = dma.done [#allocation6], 6272
    $region29: #{tpu_custom_call.1} parent=1 // pred_fallthru
      _
    // Predicated region
    $region30: #{tpu_custom_call.1} parent=1 // pred_check
      _
    $region31: #{tpu_custom_call.1} parent=1 // pred_check_branch
      %63 = sbr.rel (0) target = $region33
    $region32: #{tpu_custom_call.1} parent=1 // pred_region
      %65 = dma.done [#allocation6], 1024
    $region33: #{tpu_custom_call.1} parent=1 // pred_fallthru
      _
    %v67 = vld [vmem:[#allocation2] sm:$0xff]
    %v68 = vld [vmem:[#allocation2 + $0x8] sm:$0x3f]
    %71 = vst [vmem:[#allocation1] ss:$4 sm:$0xff] %v67
    %s72 = scalar_lea.vmem [#allocation1], 32
    %73 = vst [vmem:[%s72] ss:$4 sm:$0xff] %v68
    %v74 = vld.sshfl [vmem:[#allocation1] sm:$0xff pattern:$0x73625140]
    %v75 = vld.sshfl [vmem:[#allocation1 + $0x8] sm:$0xff pattern:$0x73625140]
    %v76 = vld.sshfl [vmem:[#allocation1 + $0x10] sm:$0xff pattern:$0x73625140]
    %v77 = vld.sshfl [vmem:[#allocation1 + $0x18] sm:$0xff pattern:$0x73625140]
    %v78 = vld.sshfl [vmem:[#allocation1 + $0x20] sm:$0xff pattern:$0x73625140]
    %v79 = vld.sshfl [vmem:[#allocation1 + $0x28] sm:$0xff pattern:$0x73625140]
    %v80 = vld.sshfl [vmem:[#allocation1 + $0x30] sm:$0xff pattern:$0x73625140]
    %v88 = vpack.c.bf16 %v74, %v74
    %v89 = vpack.c.bf16 %v75, %v75
    %v90 = vpack.c.bf16 %v76, %v76
    %v91 = vpack.c.bf16 %v77, %v77
    %v92 = vpack.c.bf16 %v78, %v78
    %v93 = vpack.c.bf16 %v79, %v79
    %v94 = vpack.c.bf16 %v80, %v80
    %v95 = vld [vmem:[#allocation5] sm:$0xf]
    %v96 = vld [vmem:[#allocation5 + $0x4] sm:$0xf]
    %v97 = vld [vmem:[#allocation5 + $0x8] sm:$0xf]
    %v98 = vld [vmem:[#allocation5 + $0xc] sm:$0xf]
    %v99 = vld [vmem:[#allocation5 + $0x10] sm:$0xf]
    %v100 = vld [vmem:[#allocation5 + $0x14] sm:$0xf]
    %v101 = vld [vmem:[#allocation5 + $0x18] sm:$0xf]
    %v102 = vld [vmem:[#allocation5 + $0x1c] sm:$0xf]
    %v103 = vld [vmem:[#allocation5 + $0x20] sm:$0xf]
    %v104 = vld [vmem:[#allocation5 + $0x24] sm:$0xf]
    %v105 = vld [vmem:[#allocation5 + $0x28] sm:$0xf]
    %v106 = vld [vmem:[#allocation5 + $0x2c] sm:$0xf]
    %v107 = vld [vmem:[#allocation5 + $0x30] sm:$0xf]
    %v108 = vld [vmem:[#allocation5 + $0x34] sm:$0xf]
    %v109 = vld [vmem:[#allocation5 + $0x38] sm:$0xf]
    %v110 = vld [vmem:[#allocation5 + $0x3c] sm:$0xf]
    %v111 = vld [vmem:[#allocation5 + $0x40] sm:$0xf]
    %v112 = vld [vmem:[#allocation5 + $0x44] sm:$0xf]
    %v113 = vld [vmem:[#allocation5 + $0x48] sm:$0xf]
    %v114 = vld [vmem:[#allocation5 + $0x4c] sm:$0xf]
    %v115 = vld [vmem:[#allocation5 + $0x50] sm:$0xf]
    %v116 = vld [vmem:[#allocation5 + $0x54] sm:$0xf]
    %v117 = vld [vmem:[#allocation5 + $0x58] sm:$0xf]
    %v118 = vld [vmem:[#allocation5 + $0x5c] sm:$0xf]
    %v119 = vld [vmem:[#allocation5 + $0x60] sm:$0xf]
    %v120 = vld [vmem:[#allocation5 + $0x64] sm:$0xf]
    %v121 = vld [vmem:[#allocation5 + $0x68] sm:$0xf]
    %v122 = vld [vmem:[#allocation5 + $0x6c] sm:$0xf]
    %v123 = vld [vmem:[#allocation5 + $0x70] sm:$0xf]
    %v124 = vld [vmem:[#allocation5 + $0x74] sm:$0xf]
    %v125 = vld [vmem:[#allocation5 + $0x78] sm:$0xf]
    %v126 = vld [vmem:[#allocation5 + $0x7c] sm:$0xf]
    %v127 = vld [vmem:[#allocation5 + $0x80] sm:$0xf]
    %v128 = vld [vmem:[#allocation5 + $0x84] sm:$0xf]
    %v129 = vld [vmem:[#allocation5 + $0x88] sm:$0xf]
    %v130 = vld [vmem:[#allocation5 + $0x8c] sm:$0xf]
    %v131 = vld [vmem:[#allocation5 + $0x90] sm:$0xf]
    %v132 = vld [vmem:[#allocation5 + $0x94] sm:$0xf]
    %v133 = vld [vmem:[#allocation5 + $0x98] sm:$0xf]
    %v134 = vld [vmem:[#allocation5 + $0x9c] sm:$0xf]
    %v135 = vld [vmem:[#allocation5 + $0xa0] sm:$0xf]
    %v136 = vld [vmem:[#allocation5 + $0xa4] sm:$0xf]
    %v137 = vld [vmem:[#allocation5 + $0xa8] sm:$0xf]
    %v138 = vld [vmem:[#allocation5 + $0xac] sm:$0xf]
    %v139 = vld [vmem:[#allocation5 + $0xb0] sm:$0xf]
    %v140 = vld [vmem:[#allocation5 + $0xb4] sm:$0xf]
    %v141 = vld [vmem:[#allocation5 + $0xb8] sm:$0xf]
    %v142 = vld [vmem:[#allocation5 + $0xbc] sm:$0xf]
    %v143 = vld [vmem:[#allocation5 + $0xc0] sm:$0xf]
    %v144 = vld [vmem:[#allocation5 + $0xc4] sm:$0xf]
    %v145 = vld [vmem:[#allocation5 + $0xc8] sm:$0xf]
    %v146 = vld [vmem:[#allocation5 + $0xcc] sm:$0xf]
    %v147 = vld [vmem:[#allocation5 + $0xd0] sm:$0xf]
    %v148 = vld [vmem:[#allocation5 + $0xd4] sm:$0xf]
    %v149 = vld [vmem:[#allocation5 + $0xd8] sm:$0xf]
    %v150 = vld [vmem:[#allocation5 + $0xdc] sm:$0xf]
    %v151 = vld [vmem:[#allocation5 + $0xe0] sm:$0xf]
    %v152 = vld [vmem:[#allocation5 + $0xe4] sm:$0xf]
    %v153 = vld [vmem:[#allocation5 + $0xe8] sm:$0xf]
    %v154 = vld [vmem:[#allocation5 + $0xec] sm:$0xf]
    %v155 = vld [vmem:[#allocation5 + $0xf0] sm:$0xf]
    %v156 = vld [vmem:[#allocation5 + $0xf4] sm:$0xf]
    %v157 = vld [vmem:[#allocation5 + $0xf8] sm:$0xf]
    %v158 = vld [vmem:[#allocation5 + $0xfc] sm:$0xf]
    %v159 = vld [vmem:[#allocation5 + $0x100] sm:$0xf]
    %v160 = vld [vmem:[#allocation5 + $0x104] sm:$0xf]
    %v161 = vld [vmem:[#allocation5 + $0x108] sm:$0xf]
    %v162 = vld [vmem:[#allocation5 + $0x10c] sm:$0xf]
    %v163 = vld [vmem:[#allocation5 + $0x110] sm:$0xf]
    %v164 = vld [vmem:[#allocation5 + $0x114] sm:$0xf]
    %v165 = vld [vmem:[#allocation5 + $0x118] sm:$0xf]
    %v166 = vld [vmem:[#allocation5 + $0x11c] sm:$0xf]
    %v167 = vld [vmem:[#allocation5 + $0x120] sm:$0xf]
    %v168 = vld [vmem:[#allocation5 + $0x124] sm:$0xf]
    %v169 = vld [vmem:[#allocation5 + $0x128] sm:$0xf]
    %v170 = vld [vmem:[#allocation5 + $0x12c] sm:$0xf]
    %v171 = vld [vmem:[#allocation5 + $0x130] sm:$0xf]
    %v172 = vld [vmem:[#allocation5 + $0x134] sm:$0xf]
    %v173 = vld [vmem:[#allocation5 + $0x138] sm:$0xf]
    %v174 = vld [vmem:[#allocation5 + $0x13c] sm:$0xf]
    %v175 = vld [vmem:[#allocation5 + $0x140] sm:$0xf]
    %v176 = vld [vmem:[#allocation5 + $0x144] sm:$0xf]
    %v177 = vld [vmem:[#allocation5 + $0x148] sm:$0xf]
    %v178 = vld [vmem:[#allocation5 + $0x14c] sm:$0xf]
    %v179 = vld [vmem:[#allocation5 + $0x150] sm:$0xf]
    %v180 = vld [vmem:[#allocation5 + $0x154] sm:$0xf]
    %v181 = vld [vmem:[#allocation5 + $0x158] sm:$0xf]
    %v182 = vld [vmem:[#allocation5 + $0x15c] sm:$0xf]
    %v183 = vld [vmem:[#allocation5 + $0x160] sm:$0xf]
    %v184 = vld [vmem:[#allocation5 + $0x164] sm:$0xf]
    %v185 = vld [vmem:[#allocation5 + $0x168] sm:$0xf]
    %v186 = vld [vmem:[#allocation5 + $0x16c] sm:$0xf]
    %v187 = vld [vmem:[#allocation5 + $0x170] sm:$0xf]
    %v188 = vld [vmem:[#allocation5 + $0x174] sm:$0xf]
    %v189 = vld [vmem:[#allocation5 + $0x178] sm:$0xf]
    %v190 = vld [vmem:[#allocation5 + $0x17c] sm:$0xf]
    %v191 = vld [vmem:[#allocation5 + $0x180] sm:$0xf]
    %v192 = vld [vmem:[#allocation5 + $0x184] sm:$0xf]
    %v193 = vld [vmem:[%s2] sm:$0x1]
    %v195 = vperm.slane %v193, 0
    %v295 = vunpack.c.l.b16 %v95
    %v296 = vunpack.c.l.b16 %v96
    %v297 = vunpack.c.l.b16 %v97
    %v298 = vunpack.c.l.b16 %v98
    %v299 = vunpack.c.l.b16 %v99
    %v300 = vunpack.c.l.b16 %v100
    %v301 = vunpack.c.l.b16 %v101
    %v302 = vunpack.c.l.b16 %v102
    %v303 = vunpack.c.l.b16 %v103
    %v304 = vunpack.c.l.b16 %v104
    %v305 = vunpack.c.l.b16 %v105
    %v306 = vunpack.c.l.b16 %v106
    %v307 = vunpack.c.l.b16 %v107
    %v308 = vunpack.c.l.b16 %v108
    %v309 = vunpack.c.l.b16 %v109
    %v310 = vunpack.c.l.b16 %v110
    %v311 = vunpack.c.l.b16 %v111
    %v312 = vunpack.c.l.b16 %v112
    %v313 = vunpack.c.l.b16 %v113
    %v314 = vunpack.c.l.b16 %v114
    %v315 = vunpack.c.l.b16 %v115
    %v316 = vunpack.c.l.b16 %v116
    %v317 = vunpack.c.l.b16 %v117
    %v318 = vunpack.c.l.b16 %v118
    %v319 = vunpack.c.l.b16 %v119
    %v320 = vunpack.c.l.b16 %v120
    %v321 = vunpack.c.l.b16 %v121
    %v322 = vunpack.c.l.b16 %v122
    %v323 = vunpack.c.l.b16 %v123
    %v324 = vunpack.c.l.b16 %v124
    %v325 = vunpack.c.l.b16 %v125
    %v326 = vunpack.c.l.b16 %v126
    %v327 = vunpack.c.l.b16 %v127
    %v328 = vunpack.c.l.b16 %v128
    %v329 = vunpack.c.l.b16 %v129
    %v330 = vunpack.c.l.b16 %v130
    %v331 = vunpack.c.l.b16 %v131
    %v332 = vunpack.c.l.b16 %v132
    %v333 = vunpack.c.l.b16 %v133
    %v334 = vunpack.c.l.b16 %v134
    %v335 = vunpack.c.l.b16 %v135
    %v336 = vunpack.c.l.b16 %v136
    %v337 = vunpack.c.l.b16 %v137
    %v338 = vunpack.c.l.b16 %v138
    %v339 = vunpack.c.l.b16 %v139
    %v340 = vunpack.c.l.b16 %v140
    %v341 = vunpack.c.l.b16 %v141
    %v342 = vunpack.c.l.b16 %v142
    %v343 = vunpack.c.l.b16 %v143
    %v344 = vunpack.c.l.b16 %v144
    %v345 = vunpack.c.l.b16 %v145
    %v346 = vunpack.c.l.b16 %v146
    %v347 = vunpack.c.l.b16 %v147
    %v348 = vunpack.c.l.b16 %v148
    %v349 = vunpack.c.l.b16 %v149
    %v350 = vunpack.c.l.b16 %v150
    %v351 = vunpack.c.l.b16 %v151
    %v352 = vunpack.c.l.b16 %v152
    %v353 = vunpack.c.l.b16 %v153
    %v354 = vunpack.c.l.b16 %v154
    %v355 = vunpack.c.l.b16 %v155
    %v356 = vunpack.c.l.b16 %v156
    %v357 = vunpack.c.l.b16 %v157
    %v358 = vunpack.c.l.b16 %v158
    %v359 = vunpack.c.l.b16 %v159
    %v360 = vunpack.c.l.b16 %v160
    %v361 = vunpack.c.l.b16 %v161
    %v362 = vunpack.c.l.b16 %v162
    %v363 = vunpack.c.l.b16 %v163
    %v364 = vunpack.c.l.b16 %v164
    %v365 = vunpack.c.l.b16 %v165
    %v366 = vunpack.c.l.b16 %v166
    %v367 = vunpack.c.l.b16 %v167
    %v368 = vunpack.c.l.b16 %v168
    %v369 = vunpack.c.l.b16 %v169
    %v370 = vunpack.c.l.b16 %v170
    %v371 = vunpack.c.l.b16 %v171
    %v372 = vunpack.c.l.b16 %v172
    %v373 = vunpack.c.l.b16 %v173
    %v374 = vunpack.c.l.b16 %v174
    %v375 = vunpack.c.l.b16 %v175
    %v376 = vunpack.c.l.b16 %v176
    %v377 = vunpack.c.l.b16 %v177
    %v378 = vunpack.c.l.b16 %v178
    %v379 = vunpack.c.l.b16 %v179
    %v380 = vunpack.c.l.b16 %v180
    %v381 = vunpack.c.l.b16 %v181
    %v382 = vunpack.c.l.b16 %v182
    %v383 = vunpack.c.l.b16 %v183
    %v384 = vunpack.c.l.b16 %v184
    %v385 = vunpack.c.l.b16 %v185
    %v386 = vunpack.c.l.b16 %v186
    %v387 = vunpack.c.l.b16 %v187
    %v388 = vunpack.c.l.b16 %v188
    %v389 = vunpack.c.l.b16 %v189
    %v390 = vunpack.c.l.b16 %v190
    %v391 = vunpack.c.l.b16 %v191
    %v392 = vunpack.c.l.b16 %v192
    %v393 = vpack.c.b16 %v296, %v295
    %v394 = vpack.c.b16 %v298, %v297
    %v395 = vpack.c.b16 %v300, %v299
    %v396 = vpack.c.b16 %v302, %v301
    %v397 = vpack.c.b16 %v304, %v303
    %v398 = vpack.c.b16 %v306, %v305
    %v399 = vpack.c.b16 %v308, %v307
    %v400 = vpack.c.b16 %v310, %v309
    %v401 = vpack.c.b16 %v312, %v311
    %v402 = vpack.c.b16 %v314, %v313
    %v403 = vpack.c.b16 %v316, %v315
    %v404 = vpack.c.b16 %v318, %v317
    %v405 = vpack.c.b16 %v320, %v319
    %v406 = vpack.c.b16 %v322, %v321
    %v407 = vpack.c.b16 %v324, %v323
    %v408 = vpack.c.b16 %v326, %v325
    %v409 = vpack.c.b16 %v328, %v327
    %v410 = vpack.c.b16 %v330, %v329
    %v411 = vpack.c.b16 %v332, %v331
    %v412 = vpack.c.b16 %v334, %v333
    %v413 = vpack.c.b16 %v336, %v335
    %v414 = vpack.c.b16 %v338, %v337
    %v415 = vpack.c.b16 %v340, %v339
    %v416 = vpack.c.b16 %v342, %v341
    %v417 = vpack.c.b16 %v344, %v343
    %v418 = vpack.c.b16 %v346, %v345
    %v419 = vpack.c.b16 %v348, %v347
    %v420 = vpack.c.b16 %v350, %v349
    %v421 = vpack.c.b16 %v352, %v351
    %v422 = vpack.c.b16 %v354, %v353
    %v423 = vpack.c.b16 %v356, %v355
    %v424 = vpack.c.b16 %v358, %v357
    %v425 = vpack.c.b16 %v360, %v359
    %v426 = vpack.c.b16 %v362, %v361
    %v427 = vpack.c.b16 %v364, %v363
    %v428 = vpack.c.b16 %v366, %v365
    %v429 = vpack.c.b16 %v368, %v367
    %v430 = vpack.c.b16 %v370, %v369
    %v431 = vpack.c.b16 %v372, %v371
    %v432 = vpack.c.b16 %v374, %v373
    %v433 = vpack.c.b16 %v376, %v375
    %v434 = vpack.c.b16 %v378, %v377
    %v435 = vpack.c.b16 %v380, %v379
    %v436 = vpack.c.b16 %v382, %v381
    %v437 = vpack.c.b16 %v384, %v383
    %v438 = vpack.c.b16 %v386, %v385
    %v439 = vpack.c.b16 %v388, %v387
    %v440 = vpack.c.b16 %v390, %v389
    %v441 = vpack.c.b16 %v392, %v391
    %vm491 = vcmask 130048
    %v493 = vsel %vm491, %v94, 0
    %495 = vmatpush.bf16.msra.mxu0 %v400
    %496 = vmatpush.bf16.msra.mxu0 %v399
    %497 = vmatpush.bf16.msra.mxu0 %v398
    %498 = vmatpush.bf16.msra.mxu0 %v397
    %499 = vmatpush.bf16.msra.mxu0 %v396
    %500 = vmatpush.bf16.msra.mxu0 %v395
    %501 = vmatpush.bf16.msra.mxu0 %v394
    %502 = vmatpush.bf16.msra.mxu0 %v393
    %503 = vmatmul.bf16.gmra.mxu0 %v88
    %v504 = vpop.f32.mrf.mxu0
    %v505 = vadd.f32 %v195, %v504
    %v506 = vpop.f32.mrf.mxu0
    %507 = vdwg.mxu0
    %508 = vmatpush.bf16.msra.mxu0 %v408
    %509 = vmatpush.bf16.msra.mxu0 %v407
    %510 = vmatpush.bf16.msra.mxu0 %v406
    %511 = vmatpush.bf16.msra.mxu0 %v405
    %512 = vmatpush.bf16.msra.mxu0 %v404
    %513 = vmatpush.bf16.msra.mxu0 %v403
    %514 = vmatpush.bf16.msra.mxu0 %v402
    %515 = vmatpush.bf16.msra.mxu0 %v401
    %516 = vmatmul.bf16.gmra.mxu0 %v89
    %v517 = vpop.f32.mrf.mxu0
    %v518 = vadd.f32 %v505, %v517
    %v519 = vpop.f32.mrf.mxu0
    %520 = vdwg.mxu0
    %521 = vmatpush.bf16.msra.mxu0 %v416
    %522 = vmatpush.bf16.msra.mxu0 %v415
    %523 = vmatpush.bf16.msra.mxu0 %v414
    %524 = vmatpush.bf16.msra.mxu0 %v413
    %525 = vmatpush.bf16.msra.mxu0 %v412
    %526 = vmatpush.bf16.msra.mxu0 %v411
    %527 = vmatpush.bf16.msra.mxu0 %v410
    %528 = vmatpush.bf16.msra.mxu0 %v409
    %529 = vmatmul.bf16.gmra.mxu0 %v90
    %v530 = vpop.f32.mrf.mxu0
    %v531 = vadd.f32 %v518, %v530
    %v532 = vpop.f32.mrf.mxu0
    %533 = vdwg.mxu0
    %534 = vmatpush.bf16.msra.mxu0 %v424
    %535 = vmatpush.bf16.msra.mxu0 %v423
    %536 = vmatpush.bf16.msra.mxu0 %v422
    %537 = vmatpush.bf16.msra.mxu0 %v421
    %538 = vmatpush.bf16.msra.mxu0 %v420
    %539 = vmatpush.bf16.msra.mxu0 %v419
    %540 = vmatpush.bf16.msra.mxu0 %v418
    %541 = vmatpush.bf16.msra.mxu0 %v417
    %542 = vmatmul.bf16.gmra.mxu0 %v91
    %v543 = vpop.f32.mrf.mxu0
    %v544 = vadd.f32 %v531, %v543
    %v545 = vpop.f32.mrf.mxu0
    %546 = vdwg.mxu0
    %547 = vmatpush.bf16.msra.mxu0 %v432
    %548 = vmatpush.bf16.msra.mxu0 %v431
    %549 = vmatpush.bf16.msra.mxu0 %v430
    %550 = vmatpush.bf16.msra.mxu0 %v429
    %551 = vmatpush.bf16.msra.mxu0 %v428
    %552 = vmatpush.bf16.msra.mxu0 %v427
    %553 = vmatpush.bf16.msra.mxu0 %v426
    %554 = vmatpush.bf16.msra.mxu0 %v425
    %555 = vmatmul.bf16.gmra.mxu0 %v92
    %v556 = vpop.f32.mrf.mxu0
    %v557 = vadd.f32 %v544, %v556
    %v558 = vpop.f32.mrf.mxu0
    %559 = vdwg.mxu0
    %560 = vmatpush.bf16.msra.mxu0 %v440
    %561 = vmatpush.bf16.msra.mxu0 %v439
    %562 = vmatpush.bf16.msra.mxu0 %v438
    %563 = vmatpush.bf16.msra.mxu0 %v437
    %564 = vmatpush.bf16.msra.mxu0 %v436
    %565 = vmatpush.bf16.msra.mxu0 %v435
    %566 = vmatpush.bf16.msra.mxu0 %v434
    %567 = vmatpush.bf16.msra.mxu0 %v433
    %568 = vmatmul.bf16.gmra.mxu0 %v93
    %v569 = vpop.f32.mrf.mxu0
    %v570 = vadd.f32 %v557, %v569
    %v571 = vpop.f32.mrf.mxu0
    %572 = vdwg.mxu0
    %573 = vmatpush.bf16.msra.mxu0 0
    %574 = vmatpush.bf16.msra.mxu0 0
    %575 = vmatpush.bf16.msra.mxu0 0
    %576 = vmatpush.bf16.msra.mxu0 0
    %577 = vmatpush.bf16.msra.mxu0 0
    %578 = vmatpush.bf16.msra.mxu0 0
    %579 = vmatpush.bf16.msra.mxu0 0
    %580 = vmatpush.bf16.msra.mxu0 %v441
    %581 = vmatmul.bf16.gmra.mxu0 %v493
    %v582 = vpop.f32.mrf.mxu0
    %v583 = vadd.f32 %v570, %v582
    %v584 = vpop.f32.mrf.mxu0
    %585 = vdwg.mxu0
    %v586 = vmax.f32 %v583, 0.0
    %v587 = vpack.c.bf16 %v586, %v586
    %v588 = vld [vmem:[#allocation7] sm:$0xf]
    %v589 = vld [vmem:[#allocation7 + $0x4] sm:$0xf]
    %v590 = vld [vmem:[#allocation7 + $0x8] sm:$0xf]
    %v591 = vld [vmem:[#allocation7 + $0xc] sm:$0xf]
    %v592 = vld [vmem:[#allocation7 + $0x10] sm:$0xf]
    %v593 = vld [vmem:[#allocation7 + $0x14] sm:$0xf]
    %v594 = vld [vmem:[#allocation7 + $0x18] sm:$0xf]
    %v595 = vld [vmem:[#allocation7 + $0x1c] sm:$0xf]
    %v596 = vld [vmem:[#allocation7 + $0x20] sm:$0xf]
    %v597 = vld [vmem:[#allocation7 + $0x24] sm:$0xf]
    %v598 = vld [vmem:[#allocation7 + $0x28] sm:$0xf]
    %v599 = vld [vmem:[#allocation7 + $0x2c] sm:$0xf]
    %v600 = vld [vmem:[#allocation7 + $0x30] sm:$0xf]
    %v601 = vld [vmem:[#allocation7 + $0x34] sm:$0xf]
    %v602 = vld [vmem:[#allocation7 + $0x38] sm:$0xf]
    %v603 = vld [vmem:[#allocation7 + $0x3c] sm:$0xf]
    %v604 = vld [vmem:[%s4] sm:$0x1]
    %v606 = vperm.slane %v604, 0
    %v624 = vunpack.c.l.b16 %v588
    %v625 = vunpack.c.l.b16 %v589
    %v626 = vunpack.c.l.b16 %v590
    %v627 = vunpack.c.l.b16 %v591
    %v628 = vunpack.c.l.b16 %v592
    %v629 = vunpack.c.l.b16 %v593
    %v630 = vunpack.c.l.b16 %v594
    %v631 = vunpack.c.l.b16 %v595
    %v632 = vunpack.c.l.b16 %v596
    %v633 = vunpack.c.l.b16 %v597
    %v634 = vunpack.c.l.b16 %v598
    %v635 = vunpack.c.l.b16 %v599
    %v636 = vunpack.c.l.b16 %v600
    %v637 = vunpack.c.l.b16 %v601
    %v638 = vunpack.c.l.b16 %v602
    %v639 = vunpack.c.l.b16 %v603
    %v640 = vpack.c.b16 %v625, %v624
    %v641 = vpack.c.b16 %v627, %v626
    %v642 = vpack.c.b16 %v629, %v628
    %v643 = vpack.c.b16 %v631, %v630
    %v644 = vpack.c.b16 %v633, %v632
    %v645 = vpack.c.b16 %v635, %v634
    %v646 = vpack.c.b16 %v637, %v636
    %v647 = vpack.c.b16 %v639, %v638
    %656 = vmatpush.bf16.msra.mxu0 %v647
    %657 = vmatpush.bf16.msra.mxu0 %v646
    %658 = vmatpush.bf16.msra.mxu0 %v645
    %659 = vmatpush.bf16.msra.mxu0 %v644
    %660 = vmatpush.bf16.msra.mxu0 %v643
    %661 = vmatpush.bf16.msra.mxu0 %v642
    %662 = vmatpush.bf16.msra.mxu0 %v641
    %663 = vmatpush.bf16.msra.mxu0 %v640
    %664 = vmatmul.bf16.gmra.mxu0 %v587
    %v665 = vpop.f32.mrf.mxu0
    %v666 = vadd.f32 %v606, %v665
    %v667 = vpop.f32.mrf.mxu0
    %668 = vdwg.mxu0
    %vm669 = vcmask 1041408
    %v670 = vsel %vm669, %v666, -inf
    %671 = vmax.xlane.f32.xlu0 %v670
    %v672 = vpop.xlane.xlu0 %671
    %v673 = vsub.f32 %v666, %v672
    %v674 = vmul.f32 %v673, 1.442695
    %v675 = vpow.pop %v674
    %v676 = vsel %vm669, %v675, 0.0
    %677 = vadd.xlane.f32.xlu0 %v676
    %v678 = vpop.xlane.xlu0 %677
    %v679 = vlog2.pop %v678
    %v680 = vmul.f32 %v679, 0.6931472
    %v681 = vsub.f32 %v673, %v680
    %vm682 = vcmask 74752
    %683 = vst.msk [vmem:[#allocation8] sm:$0x3] %vm682, %v681
    // Predicated region
    $region34: #{tpu_custom_call.1} parent=1 // pred_check
      _
    $region35: #{tpu_custom_call.1} parent=1 // pred_check_branch
      %685 = sbr.rel (0) target = $region37
    $region36: #{tpu_custom_call.1} parent=1 // pred_region
      %687 = vsyncadd [#allocation4], 0
      %s689 = sshll.u32 [#allocation8], 4
      %s690 = int_to_ptr.vmem [resolvable:$true] %s689
      %s691 = sshll.u32 %s5, 4
      %s692 = int_to_ptr.hbm [resolvable:$true] %s691
      %694 = dma.vmem_to_hbm [thread:$0]  %s690, 32, %s692, [#allocation4]
    $region37: #{tpu_custom_call.1} parent=1 // pred_fallthru
      _
    // Predicated region
    $region38: #{tpu_custom_call.1} parent=1 // pred_check
      _
    $region39: #{tpu_custom_call.1} parent=1 // pred_check_branch
      %696 = sbr.rel (0) target = $region41
    $region40: #{tpu_custom_call.1} parent=1 // pred_region
      %698 = dma.done [#allocation4], 32
    $region41: #{tpu_custom_call.1} parent=1 // pred_fallthru
      _
    %699 = vsyncpa [#allocation3], 1
    %700 = vsyncpa [#allocation6], 1
    %701 = vsyncpa [#allocation4], 1

</llo_original>
